<compile_context>
chip_gen: v7x
topology: tpu7x:2x2x1
jax: 0.10.0
libtpu: 0.0.40
codegen_flags: <defaults>
</compile_context>

<pallas_src>
import jax
import jax.numpy as jnp
import numpy as np
from jax.experimental import pallas as pl
from jax.experimental.pallas import tpu as pltpu

LN_EPS = 1e-12


def _gelu(x):
    # Exact (erf) GELU — matches torch.nn.functional.gelu / HF ACT2FN['gelu'].
    return 0.5 * x * (1.0 + jax.lax.erf(x / jnp.sqrt(2.0).astype(x.dtype)))


# --------------------------- Pallas kernel ----------------------------------


def head_transform_kernel(x_ref, w_ref, b_ref, g_ref, beta_ref, o_ref):
    """dense -> gelu -> LayerNorm, fused, for the whole [B*S, D] slab."""
    x = x_ref[...]                                            # [R, D]
    h = jnp.dot(x, w_ref[...], preferred_element_type=jnp.float32) + b_ref[...]
    h = _gelu(h)
    mu = jnp.mean(h, axis=-1, keepdims=True)
    var = jnp.mean((h - mu) ** 2, axis=-1, keepdims=True)
    o_ref[...] = (h - mu) * jax.lax.rsqrt(var + LN_EPS) * g_ref[...] + beta_ref[...]


# --------------------------- wrapper -----------------------------------------


def prediction_head_transform(hidden, params):
    B, S, D = hidden.shape
    R = B * S
    x2d = hidden.reshape(R, D)

    full = lambda shape: pl.BlockSpec(shape, lambda i: (0, 0))

    out2d = pl.pallas_call(
        head_transform_kernel,
        grid=(1,),
        in_specs=[full((R, D)),        # activations
                  full((D, D)),        # dense weight (pre-transposed)
                  full((1, D)),        # dense bias
                  full((1, D)),        # LayerNorm gamma
                  full((1, D))],       # LayerNorm beta
        out_specs=full((R, D)),
        out_shape=jax.ShapeDtypeStruct((R, D), jnp.float32),
        compiler_params=pltpu.CompilerParams(
            dimension_semantics=("arbitrary",)),
    )(x2d, params["w"], params["b"], params["ln_g"], params["ln_b"])

    return out2d.reshape(B, S, D)


# --------------------------- pure-JAX reference ------------------------------


def prediction_head_transform_ref(hidden, params):
    h = hidden @ params["w"] + params["b"][0]
    h = _gelu(h)
    mu = jnp.mean(h, axis=-1, keepdims=True)
    var = jnp.mean((h - mu) ** 2, axis=-1, keepdims=True)
    return (h - mu) * jax.lax.rsqrt(var + LN_EPS) * params["ln_g"][0] + params["ln_b"][0]


# --------------------------- main --------------------------------------------


if __name__ == "__main__":
    B, S, D = 2, 8, 32  # batch, seq, hidden_size

    key = jax.random.PRNGKey(0)
    k_w, k_b, k_x = jax.random.split(key, 3)

    params = {
        "w": (0.1 * jax.random.normal(k_w, (D, D))).astype(jnp.float32),
        "b": (0.1 * jax.random.normal(k_b, (1, D))).astype(jnp.float32),
        "ln_g": jnp.ones((1, D), jnp.float32),
        "ln_b": jnp.zeros((1, D), jnp.float32),
    }

    hidden = jax.random.normal(k_x, (B, S, D)).astype(jnp.float32)

    out = jax.block_until_ready(prediction_head_transform(hidden, params))
    ref = jax.block_until_ready(prediction_head_transform_ref(hidden, params))

    np.testing.assert_allclose(np.asarray(out), np.asarray(ref),
                               rtol=1e-4, atol=1e-4)
    print("KERNEL_OK")
</pallas_src>

<mosaic_0001>
module attributes {stable_mosaic.version = 11 : i64} {
  func.func @head_transform_kernel(%arg0: i32, %arg1: memref<16x32xf32, #tpu.memory_space<vmem>>, %arg2: memref<32x32xf32, #tpu.memory_space<vmem>>, %arg3: memref<1x32xf32, #tpu.memory_space<vmem>>, %arg4: memref<1x32xf32, #tpu.memory_space<vmem>>, %arg5: memref<1x32xf32, #tpu.memory_space<vmem>>, %arg6: memref<16x32xf32, #tpu.memory_space<vmem>>) attributes {dimension_semantics = [#tpu.dimension_semantics<arbitrary>], iteration_bounds = array<i64: 1>, scalar_prefetch = 0 : i64, scratch_operands = 0 : i64, tpu.core_type = #tpu.core_type<tc>, window_params = [{pipeline_mode = #tpu.pipeline_mode<synchronous>, transform_indices = @transform_0, window_bounds = array<i64: 16, 32>}, {pipeline_mode = #tpu.pipeline_mode<synchronous>, transform_indices = @transform_1, window_bounds = array<i64: 32, 32>}, {pipeline_mode = #tpu.pipeline_mode<synchronous>, transform_indices = @transform_2, window_bounds = array<i64: 1, 32>}, {pipeline_mode = #tpu.pipeline_mode<synchronous>, transform_indices = @transform_3, window_bounds = array<i64: 1, 32>}, {pipeline_mode = #tpu.pipeline_mode<synchronous>, transform_indices = @transform_4, window_bounds = array<i64: 1, 32>}, {pipeline_mode = #tpu.pipeline_mode<synchronous>, transform_indices = @transform_5, window_bounds = array<i64: 16, 32>}]} {
    %c0 = arith.constant 0 : index
    %c0_0 = arith.constant 0 : index
    %0 = vector.load %arg1[%c0, %c0_0] : memref<16x32xf32, #tpu.memory_space<vmem>>, vector<16x32xf32>
    %c0_1 = arith.constant 0 : index
    %c0_2 = arith.constant 0 : index
    %1 = vector.load %arg2[%c0_1, %c0_2] : memref<32x32xf32, #tpu.memory_space<vmem>>, vector<32x32xf32>
    %cst = arith.constant dense<0.000000e+00> : vector<16x32xf32>
    %2 = tpu.matmul %0, %1, %cst {dimension_numbers = #tpu.dot_dimension_numbers<[1], [0], [0], [1], [0, 0, 1, 1], [], []>} : vector<16x32xf32>, vector<32x32xf32>, vector<16x32xf32> -> vector<16x32xf32>
    %c0_3 = arith.constant 0 : index
    %c0_4 = arith.constant 0 : index
    %3 = vector.load %arg3[%c0_3, %c0_4] : memref<1x32xf32, #tpu.memory_space<vmem>>, vector<1x32xf32>
    %4 = vector.broadcast %3 : vector<1x32xf32> to vector<16x32xf32>
    %5 = arith.addf %2, %4 : vector<16x32xf32>
    %cst_5 = arith.constant 5.000000e-01 : f32
    %6 = vector.broadcast %cst_5 : f32 to vector<16x32xf32>
    %7 = arith.mulf %6, %5 : vector<16x32xf32>
    %cst_6 = arith.constant 2.000000e+00 : f32
    %8 = math.sqrt %cst_6 : f32
    %9 = vector.broadcast %8 : f32 to vector<16x32xf32>
    %10 = arith.divf %5, %9 : vector<16x32xf32>
    %11 = math.erf %10 : vector<16x32xf32>
    %cst_7 = arith.constant 1.000000e+00 : f32
    %12 = vector.broadcast %cst_7 : f32 to vector<16x32xf32>
    %13 = arith.addf %12, %11 : vector<16x32xf32>
    %14 = arith.mulf %7, %13 : vector<16x32xf32>
    %cst_8 = arith.constant dense<0.000000e+00> : vector<16xf32>
    %15 = vector.multi_reduction <add>, %14, %cst_8 [1] : vector<16x32xf32> to vector<16xf32>
    %16 = vector.shape_cast %15 : vector<16xf32> to vector<16x1xf32>
    %cst_9 = arith.constant 3.200000e+01 : f32
    %17 = vector.broadcast %cst_9 : f32 to vector<16x1xf32>
    %18 = arith.divf %16, %17 : vector<16x1xf32>
    %19 = vector.broadcast %18 : vector<16x1xf32> to vector<16x32xf32>
    %20 = arith.subf %14, %19 : vector<16x32xf32>
    %21 = arith.mulf %20, %20 : vector<16x32xf32>
    %cst_10 = arith.constant dense<0.000000e+00> : vector<16xf32>
    %22 = vector.multi_reduction <add>, %21, %cst_10 [1] : vector<16x32xf32> to vector<16xf32>
    %23 = vector.shape_cast %22 : vector<16xf32> to vector<16x1xf32>
    %cst_11 = arith.constant 3.200000e+01 : f32
    %24 = vector.broadcast %cst_11 : f32 to vector<16x1xf32>
    %25 = arith.divf %23, %24 : vector<16x1xf32>
    %26 = vector.broadcast %18 : vector<16x1xf32> to vector<16x32xf32>
    %27 = arith.subf %14, %26 : vector<16x32xf32>
    %cst_12 = arith.constant 9.99999996E-13 : f32
    %28 = vector.broadcast %cst_12 : f32 to vector<16x1xf32>
    %29 = arith.addf %25, %28 : vector<16x1xf32>
    %30 = math.rsqrt %29 : vector<16x1xf32>
    %31 = vector.broadcast %30 : vector<16x1xf32> to vector<16x32xf32>
    %32 = arith.mulf %27, %31 : vector<16x32xf32>
    %c0_13 = arith.constant 0 : index
    %c0_14 = arith.constant 0 : index
    %33 = vector.load %arg4[%c0_13, %c0_14] : memref<1x32xf32, #tpu.memory_space<vmem>>, vector<1x32xf32>
    %34 = vector.broadcast %33 : vector<1x32xf32> to vector<16x32xf32>
    %35 = arith.mulf %32, %34 : vector<16x32xf32>
    %c0_15 = arith.constant 0 : index
    %c0_16 = arith.constant 0 : index
    %36 = vector.load %arg5[%c0_15, %c0_16] : memref<1x32xf32, #tpu.memory_space<vmem>>, vector<1x32xf32>
    %37 = vector.broadcast %36 : vector<1x32xf32> to vector<16x32xf32>
    %38 = arith.addf %35, %37 : vector<16x32xf32>
    %c0_17 = arith.constant 0 : index
    %c0_18 = arith.constant 0 : index
    %39 = vector.load %arg6[%c0_17, %c0_18] : memref<16x32xf32, #tpu.memory_space<vmem>>, vector<16x32xf32>
    tpu.vector_store %arg6[%c0_17, %c0_18], %38 {strides = array<i32>} : memref<16x32xf32, #tpu.memory_space<vmem>>, vector<16x32xf32>,
    return
  }
  func.func @transform_0(%arg0: i32) -> (i32, i32) {
    %c0_i32 = arith.constant 0 : i32
    %c0_i32_0 = arith.constant 0 : i32
    %c0_i32_1 = arith.constant 0 : i32
    return %c0_i32, %c0_i32_0 : i32, i32
  }
  func.func @transform_1(%arg0: i32) -> (i32, i32) {
    %c0_i32 = arith.constant 0 : i32
    %c0_i32_0 = arith.constant 0 : i32
    %c0_i32_1 = arith.constant 0 : i32
    return %c0_i32, %c0_i32_0 : i32, i32
  }
  func.func @transform_2(%arg0: i32) -> (i32, i32) {
    %c0_i32 = arith.constant 0 : i32
    %c0_i32_0 = arith.constant 0 : i32
    %c0_i32_1 = arith.constant 0 : i32
    return %c0_i32, %c0_i32_0 : i32, i32
  }
  func.func @transform_3(%arg0: i32) -> (i32, i32) {
    %c0_i32 = arith.constant 0 : i32
    %c0_i32_0 = arith.constant 0 : i32
    %c0_i32_1 = arith.constant 0 : i32
    return %c0_i32, %c0_i32_0 : i32, i32
  }
  func.func @transform_4(%arg0: i32) -> (i32, i32) {
    %c0_i32 = arith.constant 0 : i32
    %c0_i32_0 = arith.constant 0 : i32
    %c0_i32_1 = arith.constant 0 : i32
    return %c0_i32, %c0_i32_0 : i32, i32
  }
  func.func @transform_5(%arg0: i32) -> (i32, i32) {
    %c0_i32 = arith.constant 0 : i32
    %c0_i32_0 = arith.constant 0 : i32
    %c0_i32_1 = arith.constant 0 : i32
    return %c0_i32, %c0_i32_0 : i32, i32
  }
}

</mosaic_0001>

<llo_original>
// kernel: tpu_custom_call.1
$region0: #{tpu_custom_call.1}
  #allocation0 [shape = 'u32[]', space=smem, size = 0x4, offset = 0x4, fixed_abs, tag = 'smem constant byte address 0x4 - core index']
  #allocation1 [shape = 'u32[144,128]{1,0:T(1,128)}', space=vmem, size = 0x12000, scoped, tag = 'internal scratch']
  %s0 = inlined_call_operand.hbm [shape: f32[16,32], index: 0, kind: input, shape index: {}]
  %s1 = inlined_call_operand.hbm [shape: f32[32,32], index: 1, kind: input, shape index: {}]
  %s2 = inlined_call_operand.vmem [shape: f32[1,32], index: 2, kind: input, shape index: {}]
  %s3 = inlined_call_operand.vmem [shape: f32[1,32], index: 3, kind: input, shape index: {}]
  %s4 = inlined_call_operand.vmem [shape: f32[1,32], index: 4, kind: input, shape index: {}]
  %s5 = inlined_call_operand.hbm [shape: f32[16,32], index: 5, kind: output, shape index: {}]
  %s6 = sld [smem:[#allocation0]]
  $region38: #{tpu_custom_call.1} parent=0
    _
  %s8 = ssub.s32 1, %s6
  %s9 = scalar_select 0, %s8, %s6
  $region1: #{tpu_custom_call.1} parent=0
    #allocation2 [shape = 'u8[8192]{0}', space=vmem, size = 0x2000, scoped, tag = 'input window, operand 0, single buffered']
    #allocation3 [shape = 's32[1]{0}', space=sflag, size = 0x4, scoped, tag = 'scoped memory for tpu_custom_call.1']
    #allocation4 [shape = 's32[1]{0}', space=sflag, size = 0x4, scoped, tag = 'scoped memory for tpu_custom_call.1']
    #allocation5 [shape = 'u8[16384]{0}', space=vmem, size = 0x4000, scoped, tag = 'input window, operand 1, single buffered']
    #allocation6 [shape = 's32[1]{0}', space=sflag, size = 0x4, scoped, tag = 'scoped memory for tpu_custom_call.1']
    #allocation7 [shape = 'u8[8192]{0}', space=vmem, size = 0x2000, scoped, tag = 'output window, operand 0, single buffered']
    %10 = vsyncpa [#allocation3], 0
    %11 = vsyncpa [#allocation6], 0
    %12 = vsyncpa [#allocation4], 0
    // Predicated region
    $region2: #{tpu_custom_call.1} parent=1 // pred_check
      _
    $region3: #{tpu_custom_call.1} parent=1 // pred_check_branch
      %14 = sbr.rel (0) target = $region5
    $region4: #{tpu_custom_call.1} parent=1 // pred_region
      %s16 = ssub.s32 256, 256
      %17 = vsyncadd [#allocation3], %s16
      %s18 = sshll.u32 [#allocation2], 4
      %s19 = int_to_ptr.vmem [resolvable:$true] %s18
      %24 = dma.hbm_to_vmem [thread:$0]  %s0, 256, %s19, [#allocation3], 128, 128, 8
    $region5: #{tpu_custom_call.1} parent=1 // pred_fallthru
      _
    // Predicated region
    $region6: #{tpu_custom_call.1} parent=1 // pred_check
      _
    $region7: #{tpu_custom_call.1} parent=1 // pred_check_branch
      %26 = sbr.rel (0) target = $region9
    $region8: #{tpu_custom_call.1} parent=1 // pred_region
      %s28 = ssub.s32 512, 512
      %29 = vsyncadd [#allocation6], %s28
      %s30 = sshll.u32 [#allocation5], 4
      %s31 = int_to_ptr.vmem [resolvable:$true] %s30
      %36 = dma.hbm_to_vmem [thread:$0]  %s1, 512, %s31, [#allocation6], 128, 128, 8
    $region9: #{tpu_custom_call.1} parent=1 // pred_fallthru
      _
    // Predicated region
    $region10: #{tpu_custom_call.1} parent=1 // pred_check
      _
    $region11: #{tpu_custom_call.1} parent=1 // pred_check_branch
      %38 = sbr.rel (0) target = $region13
    $region12: #{tpu_custom_call.1} parent=1 // pred_region
      _
    $region13: #{tpu_custom_call.1} parent=1 // pred_fallthru
      _
    // Predicated region
    $region14: #{tpu_custom_call.1} parent=1 // pred_check
      _
    $region15: #{tpu_custom_call.1} parent=1 // pred_check_branch
      %40 = sbr.rel (0) target = $region17
    $region16: #{tpu_custom_call.1} parent=1 // pred_region
      _
    $region17: #{tpu_custom_call.1} parent=1 // pred_fallthru
      _
    // Predicated region
    $region18: #{tpu_custom_call.1} parent=1 // pred_check
      _
    $region19: #{tpu_custom_call.1} parent=1 // pred_check_branch
      %42 = sbr.rel (0) target = $region21
    $region20: #{tpu_custom_call.1} parent=1 // pred_region
      _
    $region21: #{tpu_custom_call.1} parent=1 // pred_fallthru
      _
    // Predicated region
    $region22: #{tpu_custom_call.1} parent=1 // pred_check
      _
    $region23: #{tpu_custom_call.1} parent=1 // pred_check_branch
      %44 = sbr.rel (0) target = $region25
    $region24: #{tpu_custom_call.1} parent=1 // pred_region
      %45 = dma.done [#allocation3], 256
    $region25: #{tpu_custom_call.1} parent=1 // pred_fallthru
      _
    // Predicated region
    $region26: #{tpu_custom_call.1} parent=1 // pred_check
      _
    $region27: #{tpu_custom_call.1} parent=1 // pred_check_branch
      %47 = sbr.rel (0) target = $region29
    $region28: #{tpu_custom_call.1} parent=1 // pred_region
      %48 = dma.done [#allocation6], 512
    $region29: #{tpu_custom_call.1} parent=1 // pred_fallthru
      _
    %v49 = vld [vmem:[#allocation2] sm:$0xff]
    %v50 = vld [vmem:[#allocation2 + $0x8] sm:$0xff]
    %v51 = vld [vmem:[#allocation5] sm:$0xff]
    %v52 = vld [vmem:[#allocation5 + $0x8] sm:$0xff]
    %v53 = vld [vmem:[#allocation5 + $0x10] sm:$0xff]
    %v54 = vld [vmem:[#allocation5 + $0x18] sm:$0xff]
    %v55 = vld [vmem:[%s2] sm:$0x1]
    %v57 = vlaneseq
    %v58 = vshrl.u32 %v57, 7
    %v59 = vsub.s32 0, %v58
    %v60 = vrot.slane %v55, %v59
    %vm62 = vcmask 261120
    %v64 = vsel %vm62, %v49, 0
    %v67 = vsel %vm62, %v50, 0
    %69 = vmatprep.subr.mxu0 0.0
    %70 = vmatpush1.msra.mxu0 %v51
    %71 = vmatprep.subr.mxu0 0.0
    %72 = vmatpush1.msra.mxu0 %v52
    %73 = vmatprep.subr.mxu0 0.0
    %74 = vmatpush1.msra.mxu0 %v53
    %75 = vmatprep.subr.mxu0 0.0
    %76 = vmatpush1.msra.mxu0 %v54
    %77 = vmatprep.subr.mxu0 0.0
    %78 = vmatpush1.msra.mxu0 0.0
    %79 = vmatprep.subr.mxu0 0.0
    %80 = vmatpush1.msra.mxu0 0.0
    %81 = vmatprep.subr.mxu0 0.0
    %82 = vmatpush1.msra.mxu0 0.0
    %83 = vmatprep.subr.mxu0 0.0
    %84 = vmatpush1.msra.mxu0 0.0
    %85 = vmatprep.subr.mxu0 0.0
    %86 = vmatpush1.msra.mxu0 0.0
    %87 = vmatprep.subr.mxu0 0.0
    %88 = vmatpush1.msra.mxu0 0.0
    %89 = vmatprep.subr.mxu0 0.0
    %90 = vmatpush1.msra.mxu0 0.0
    %91 = vmatprep.subr.mxu0 0.0
    %92 = vmatpush1.msra.mxu0 0.0
    %93 = vmatprep.subr.mxu0 0.0
    %94 = vmatpush1.msra.mxu0 0.0
    %95 = vmatprep.subr.mxu0 0.0
    %96 = vmatpush1.msra.mxu0 0.0
    %97 = vmatprep.subr.mxu0 0.0
    %98 = vmatpush1.msra.mxu0 0.0
    %99 = vmatprep.subr.mxu0 0.0
    %100 = vmatpush1.msra.mxu0 0.0
    %101 = vmatprep.subr.mxu0 0.0
    %102 = vmatpush1.msra.mxu0 0.0
    %103 = vmatprep.subr.mxu0 0.0
    %104 = vmatpush1.msra.mxu0 0.0
    %105 = vmatprep.subr.mxu0 0.0
    %106 = vmatpush1.msra.mxu0 0.0
    %107 = vmatprep.subr.mxu0 0.0
    %108 = vmatpush1.msra.mxu0 0.0
    %109 = vmatprep.subr.mxu0 0.0
    %110 = vmatpush1.msra.mxu0 0.0
    %111 = vmatprep.subr.mxu0 0.0
    %112 = vmatpush1.msra.mxu0 0.0
    %113 = vmatprep.subr.mxu0 0.0
    %114 = vmatpush1.msra.mxu0 0.0
    %115 = vmatprep.subr.mxu0 0.0
    %116 = vmatpush1.msra.mxu0 0.0
    %117 = vmatprep.subr.mxu0 0.0
    %118 = vmatpush1.msra.mxu0 0.0
    %119 = vmatprep.subr.mxu0 0.0
    %120 = vmatpush1.msra.mxu0 0.0
    %121 = vmatprep.subr.mxu0 0.0
    %122 = vmatpush1.msra.mxu0 0.0
    %123 = vmatprep.subr.mxu0 0.0
    %124 = vmatpush1.msra.mxu0 0.0
    %125 = vmatprep.subr.mxu0 0.0
    %126 = vmatpush1.msra.mxu0 0.0
    %127 = vmatprep.subr.mxu0 0.0
    %128 = vmatpush1.msra.mxu0 0.0
    %129 = vmatprep.subr.mxu0 0.0
    %130 = vmatpush1.msra.mxu0 0.0
    %131 = vmatprep.subr.mxu0 0.0
    %132 = vmatpush1.msra.mxu0 0.0
    %133 = vmatprep.mubr.f32.mxu0 0.0
    %134 = vmatmul.mubr.f32.gmra.mrb[0].mxu0 %v64
    %v135 = vpop.f32.mrb[0].mxu0
    %v136 = vadd.f32 %v60, %v135
    %v137 = vpop.f32.mrb[0].mxu0
    %138 = vmatprep.mubr.f32.mxu0 0.0
    %139 = vmatmul.mubr.f32.gmra.mrb[0].mxu0 %v67
    %v140 = vpop.f32.mrb[0].mxu0
    %v141 = vadd.f32 %v60, %v140
    %v142 = vpop.f32.mrb[0].mxu0
    %143 = vdwg.mxu0
    %v144 = vmul.f32 %v136, 0.5
    %v145 = vmul.f32 %v141, 0.5
    %v146 = vrcp.pop 1.4142135
    %v147 = vmul.f32 %v136, %v146
    %v148 = vmul.f32 %v141, %v146
    %v149 = verf.f32.pop %v147
    %v150 = verf.f32.pop %v148
    %v151 = vadd.f32 %v149, 1.0
    %v152 = vadd.f32 %v150, 1.0
    %v153 = vmul.f32 %v144, %v151
    %v154 = vmul.f32 %v145, %v152
    %v155 = vsel %vm62, %v153, 0.0
    %156 = vadd.xlane.f32.xlu0 %v155
    %v157 = vpop.xlane.xlu0 %156
    %v158 = vsel %vm62, %v154, 0.0
    %159 = vadd.xlane.f32.xlu0 %v158
    %v160 = vpop.xlane.xlu0 %159
    %v161 = vrcp.pop 32.0
    %v162 = vmul.f32 %v157, %v161
    %v163 = vmul.f32 %v160, %v161
    %v164 = vsub.f32 %v153, %v162
    %v165 = vsub.f32 %v154, %v163
    %v166 = vmul.f32 %v164, %v164
    %v167 = vmul.f32 %v165, %v165
    %v168 = vsel %vm62, %v166, 0.0
    %169 = vadd.xlane.f32.xlu0 %v168
    %v170 = vpop.xlane.xlu0 %169
    %v171 = vsel %vm62, %v167, 0.0
    %172 = vadd.xlane.f32.xlu0 %v171
    %v173 = vpop.xlane.xlu0 %172
    %v174 = vmul.f32 %v170, %v161
    %v175 = vmul.f32 %v173, %v161
    %v176 = vadd.f32 %v174, 1e-12
    %v177 = vadd.f32 %v175, 1e-12
    %v178 = vrsqrt.pop %v176
    %v179 = vrsqrt.pop %v177
    %v180 = vmul.f32 %v164, %v178
    %v181 = vmul.f32 %v165, %v179
    %v182 = vld [vmem:[%s3] sm:$0x1]
    %v184 = vlaneseq
    %v185 = vshrl.u32 %v184, 7
    %v186 = vsub.s32 0, %v185
    %v187 = vrot.slane %v182, %v186
    %v189 = vmul.f32 %v180, %v187
    %v190 = vmul.f32 %v181, %v187
    %v191 = vld [vmem:[%s4] sm:$0x1]
    %v193 = vlaneseq
    %v194 = vshrl.u32 %v193, 7
    %v195 = vsub.s32 0, %v194
    %v196 = vrot.slane %v191, %v195
    %v198 = vadd.f32 %v189, %v196
    %v199 = vadd.f32 %v190, %v196
    %200 = vst.msk [vmem:[#allocation7] sm:$0xff] %vm62, %v198
    %201 = vst.msk [vmem:[#allocation7 + $0x8] sm:$0xff] %vm62, %v199
    // Predicated region
    $region30: #{tpu_custom_call.1} parent=1 // pred_check
      _
    $region31: #{tpu_custom_call.1} parent=1 // pred_check_branch
      %203 = sbr.rel (0) target = $region33
    $region32: #{tpu_custom_call.1} parent=1 // pred_region
      %s205 = ssub.s32 256, 256
      %206 = vsyncadd [#allocation4], %s205
      %s207 = sshll.u32 [#allocation7], 4
      %s208 = int_to_ptr.vmem [resolvable:$true] %s207
      %213 = dma.vmem_to_hbm [thread:$0]  %s208, 256, %s5, [#allocation4], 128, 128, 8
    $region33: #{tpu_custom_call.1} parent=1 // pred_fallthru
      _
    // Predicated region
    $region34: #{tpu_custom_call.1} parent=1 // pred_check
      _
    $region35: #{tpu_custom_call.1} parent=1 // pred_check_branch
      %215 = sbr.rel (0) target = $region37
    $region36: #{tpu_custom_call.1} parent=1 // pred_region
      %216 = dma.done [#allocation4], 256
    $region37: #{tpu_custom_call.1} parent=1 // pred_fallthru
      _
    %217 = vsyncpa [#allocation3], 1
    %218 = vsyncpa [#allocation6], 1
    %219 = vsyncpa [#allocation4], 1

</llo_original>
